<compile_context>
chip_gen: v5e
topology: v5e:2x2
jax: 0.10.0
libtpu: 0.0.40
codegen_flags: <defaults>
</compile_context>

<pallas_src>
import numpy as np
import jax
import jax.numpy as jnp
from jax.experimental import pallas as pl
from jax.experimental.pallas import tpu as pltpu

NEG_SLOPE = 0.01  # PyTorch nn.LeakyReLU default negative_slope


def _make_kernel(n_neigh):
    """Build the per-type kernel for a static number of neighbor embeddings."""

    def kernel(w_ref, b_ref, h_ref, *refs):
        # w_ref : (2, D)        VMEM  row 0 = w1 (center half), row 1 = w2 (candidate half)
        # b_ref : (1,)          SMEM  scalar bias
        # h_ref : (Bt, D)       VMEM  center embeddings (batch on sublanes, dim on lanes)
        # refs  : K x (Bt, D)   VMEM  neighbor embeddings, then out_ref (Bt, D)
        e_refs = refs[:n_neigh]
        out_ref = refs[n_neigh]

        w = w_ref[...].astype(jnp.float32)                    # (2, D)
        w1 = w[0:1, :]                                        # (1, D)
        w2 = w[1:2, :]                                        # (1, D)
        bias = b_ref[0]                                       # scalar from SMEM

        h = h_ref[...].astype(jnp.float32)                    # (Bt, D)
        es = [r[...].astype(jnp.float32) for r in e_refs]     # K x (Bt, D)

        # Linear(cat(h, cand_t)) = <h, w1> + <cand_t, w2> + bias
        s_center = jnp.sum(h * w1, axis=1, keepdims=True) + bias      # (Bt, 1)
        cols = [jnp.sum(ek * w2, axis=1, keepdims=True) for ek in es]
        cols.append(jnp.sum(h * w2, axis=1, keepdims=True))           # center candidate last
        scores = jnp.concatenate(cols, axis=1) + s_center             # (Bt, K+1)

        # LeakyReLU, then softmax over the candidate (lane) axis.
        scores = jnp.where(scores >= 0, scores, NEG_SLOPE * scores)
        m = jnp.max(scores, axis=1, keepdims=True)
        p = jnp.exp(scores - m)
        a = p * (1.0 / jnp.sum(p, axis=1, keepdims=True))             # (Bt, K+1)

        # Weighted combination (center weight is the last candidate column).
        # Static loop keeps temporaries at (Bt, D): no (K, Bt, D) intermediate.
        out = a[:, n_neigh:n_neigh + 1] * h
        for k in range(n_neigh):
            out = out + a[:, k:k + 1] * es[k]
        out_ref[...] = out.astype(out_ref.dtype)

    return kernel


def att_conv_forward(ntypes, params, h_neigh, h_center, *,
                     max_b_tile=1024, vmem_budget_bytes=8 * 1024 * 1024):
    """Fused ATTConv forward (non-block graph: h_dst == h_center).

    params[n]   = (w, b) with w: (2*D,) [center half first], b: scalar
    h_center[n] = (B_n, D);  h_neigh[n] = list of K arrays (B_n, D)
    Returns dict n -> (B_n, D).
    """
    outputs = {}
    for n in ntypes:
        h = h_center[n]
        neighs = list(h_neigh[n])
        B, D = h.shape
        K = len(neighs)
        dtype = h.dtype
        itemsize = jnp.dtype(dtype).itemsize

        # Batch tile: sized so (K+1 inputs + 1 output), double-buffered, stay
        # within a conservative VMEM budget (fits v5e's 16 MiB scoped default).
        bytes_per_row = (K + 2) * 2 * D * itemsize
        cap = max(8, (vmem_budget_bytes // bytes_per_row) // 8 * 8)
        b_tile = min(max_b_tile, cap)
        if B <= b_tile:
            b_tile = B                      # single full-extent batch block
            grid_b = 1
        else:
            grid_b = pl.cdiv(B, b_tile)     # ragged tail handled by OOB masking

        w, b = params[n]
        w2d = jnp.reshape(w, (2, D))                        # row 0 = w1, row 1 = w2
        b1 = jnp.reshape(b, (1,)).astype(jnp.float32)       # SMEM scalar

        tile_spec = pl.BlockSpec((b_tile, D), lambda bi: (bi, 0))
        out = pl.pallas_call(
            _make_kernel(K),
            out_shape=jax.ShapeDtypeStruct((B, D), dtype),
            grid=(grid_b,),
            in_specs=[
                pl.BlockSpec((2, D), lambda bi: (0, 0)),
                pl.BlockSpec(memory_space=pltpu.MemorySpace.SMEM),
                tile_spec,
            ] + [tile_spec for _ in range(K)],
            out_specs=tile_spec,
            compiler_params=pltpu.CompilerParams(
                dimension_semantics=("parallel",)),
        )(w2d, b1, h, *neighs)
        outputs[n] = out
    return outputs


def att_conv_reference(ntypes, dim, params, h_neigh, h_center):
    """Pure-JAX transcription of the torch forward, for verification."""
    outs = {}
    for n in ntypes:
        h = h_center[n]
        B = h.shape[0]
        emb = list(h_neigh[n]) + [h]
        T = len(emb)
        concat_h = jnp.concatenate(
            [jnp.concatenate([h, e], axis=1) for e in emb], axis=1
        ).reshape(B * T, 2 * dim)
        w, b = params[n]
        s = concat_h @ w + b
        s = jnp.where(s >= 0, s, NEG_SLOPE * s).reshape(B, T)
        a = jax.nn.softmax(s, axis=1)
        E = jnp.stack(emb, axis=1)
        outs[n] = jnp.einsum("bt,btd->bd", a, E)
    return outs


if __name__ == "__main__":
    # TODO(synk): DGL block-graph handling (hg.is_block / number_of_dst_nodes
    # slicing) is graph bookkeeping outside the kernel; not implemented here.

    def make_case(key, ntypes, dim, batch_sizes, n_neigh):
        params, h_center, h_neigh = {}, {}, {}
        for n, bsz in zip(ntypes, batch_sizes):
            key, kw, kb, kh = jax.random.split(key, 4)
            bound = 1.0 / np.sqrt(2 * dim)
            w = jax.random.uniform(kw, (2 * dim,), jnp.float32, -bound, bound)
            b = jax.random.uniform(kb, (), jnp.float32, -bound, bound)
            params[n] = (w, b)
            h_center[n] = jax.random.normal(kh, (bsz, dim), jnp.float32)
            neighs = []
            for _ in range(n_neigh):
                key, kn = jax.random.split(key)
                neighs.append(jax.random.normal(kn, (bsz, dim), jnp.float32))
            h_neigh[n] = neighs
        return key, params, h_center, h_neigh

    ntypes = ["paper", "author", "venue"]   # T = len(ntypes)+1 = 4 candidates
    dim = 32
    key = jax.random.PRNGKey(0)

    # Case 1: small batch — single full-extent batch block per type.
    key, params, h_center, h_neigh = make_case(key, ntypes, dim, [8, 8, 8], len(ntypes))
    out = att_conv_forward(ntypes, params, h_neigh, h_center)
    jax.block_until_ready(out)
    ref = att_conv_reference(ntypes, dim, params, h_neigh, h_center)
    for n in ntypes:
        np.testing.assert_allclose(np.asarray(out[n]), np.asarray(ref[n]),
                                   rtol=1e-5, atol=1e-5)

    # Case 2: ragged per-type batches — exercises batch tiling with grids that
    # do not evenly divide the batch (OOB tail masking) and no cross-type
    # padding.
    key, params, h_center, h_neigh = make_case(key, ntypes, dim, [300, 260, 129], len(ntypes))
    out = att_conv_forward(ntypes, params, h_neigh, h_center, max_b_tile=128)
    jax.block_until_ready(out)
    ref = att_conv_reference(ntypes, dim, params, h_neigh, h_center)
    for n in ntypes:
        np.testing.assert_allclose(np.asarray(out[n]), np.asarray(ref[n]),
                                   rtol=1e-5, atol=1e-5)

    print("KERNEL_OK")
</pallas_src>

<mosaic_0001>
module attributes {stable_mosaic.version = 11 : i64} {
  func.func @kernel(%arg0: i32, %arg1: memref<2x32xf32, #tpu.memory_space<vmem>>, %arg2: memref<1xf32, #tpu.memory_space<smem>>, %arg3: memref<8x32xf32, #tpu.memory_space<vmem>>, %arg4: memref<8x32xf32, #tpu.memory_space<vmem>>, %arg5: memref<8x32xf32, #tpu.memory_space<vmem>>, %arg6: memref<8x32xf32, #tpu.memory_space<vmem>>, %arg7: memref<8x32xf32, #tpu.memory_space<vmem>>) attributes {dimension_semantics = [#tpu.dimension_semantics<parallel>], iteration_bounds = array<i64: 1>, scalar_prefetch = 0 : i64, scratch_operands = 0 : i64, tpu.core_type = #tpu.core_type<tc>, window_params = [{pipeline_mode = #tpu.pipeline_mode<synchronous>, transform_indices = @transform_0, window_bounds = array<i64: 2, 32>}, {transform_indices = @transform_1, window_bounds = array<i64: 1>}, {transform_indices = @transform_2, window_bounds = array<i64: 8, 32>}, {transform_indices = @transform_3, window_bounds = array<i64: 8, 32>}, {transform_indices = @transform_4, window_bounds = array<i64: 8, 32>}, {transform_indices = @transform_5, window_bounds = array<i64: 8, 32>}, {transform_indices = @transform_6, window_bounds = array<i64: 8, 32>}]} {
    %c0 = arith.constant 0 : index
    %c0_0 = arith.constant 0 : index
    %0 = vector.load %arg1[%c0, %c0_0] : memref<2x32xf32, #tpu.memory_space<vmem>>, vector<2x32xf32>
    %1 = vector.extract_strided_slice %0 {offsets = [0, 0], sizes = [1, 32], strides = [1, 1]} : vector<2x32xf32> to vector<1x32xf32>
    %2 = vector.extract_strided_slice %0 {offsets = [1, 0], sizes = [1, 32], strides = [1, 1]} : vector<2x32xf32> to vector<1x32xf32>
    %c0_1 = arith.constant 0 : index
    %3 = memref.load %arg2[%c0_1] : memref<1xf32, #tpu.memory_space<smem>>
    %c0_2 = arith.constant 0 : index
    %c0_3 = arith.constant 0 : index
    %4 = vector.load %arg3[%c0_2, %c0_3] : memref<8x32xf32, #tpu.memory_space<vmem>>, vector<8x32xf32>
    %c0_4 = arith.constant 0 : index
    %c0_5 = arith.constant 0 : index
    %5 = vector.load %arg4[%c0_4, %c0_5] : memref<8x32xf32, #tpu.memory_space<vmem>>, vector<8x32xf32>
    %c0_6 = arith.constant 0 : index
    %c0_7 = arith.constant 0 : index
    %6 = vector.load %arg5[%c0_6, %c0_7] : memref<8x32xf32, #tpu.memory_space<vmem>>, vector<8x32xf32>
    %c0_8 = arith.constant 0 : index
    %c0_9 = arith.constant 0 : index
    %7 = vector.load %arg6[%c0_8, %c0_9] : memref<8x32xf32, #tpu.memory_space<vmem>>, vector<8x32xf32>
    %8 = vector.broadcast %1 : vector<1x32xf32> to vector<8x32xf32>
    %9 = arith.mulf %4, %8 : vector<8x32xf32>
    %cst = arith.constant dense<0.000000e+00> : vector<8xf32>
    %10 = vector.multi_reduction <add>, %9, %cst [1] : vector<8x32xf32> to vector<8xf32>
    %11 = vector.shape_cast %10 : vector<8xf32> to vector<8x1xf32>
    %12 = vector.broadcast %3 : f32 to vector<8x1xf32>
    %13 = arith.addf %11, %12 : vector<8x1xf32>
    %14 = vector.broadcast %2 : vector<1x32xf32> to vector<8x32xf32>
    %15 = arith.mulf %5, %14 : vector<8x32xf32>
    %cst_10 = arith.constant dense<0.000000e+00> : vector<8xf32>
    %16 = vector.multi_reduction <add>, %15, %cst_10 [1] : vector<8x32xf32> to vector<8xf32>
    %17 = vector.shape_cast %16 : vector<8xf32> to vector<8x1xf32>
    %18 = vector.broadcast %2 : vector<1x32xf32> to vector<8x32xf32>
    %19 = arith.mulf %6, %18 : vector<8x32xf32>
    %cst_11 = arith.constant dense<0.000000e+00> : vector<8xf32>
    %20 = vector.multi_reduction <add>, %19, %cst_11 [1] : vector<8x32xf32> to vector<8xf32>
    %21 = vector.shape_cast %20 : vector<8xf32> to vector<8x1xf32>
    %22 = vector.broadcast %2 : vector<1x32xf32> to vector<8x32xf32>
    %23 = arith.mulf %7, %22 : vector<8x32xf32>
    %cst_12 = arith.constant dense<0.000000e+00> : vector<8xf32>
    %24 = vector.multi_reduction <add>, %23, %cst_12 [1] : vector<8x32xf32> to vector<8xf32>
    %25 = vector.shape_cast %24 : vector<8xf32> to vector<8x1xf32>
    %26 = vector.broadcast %2 : vector<1x32xf32> to vector<8x32xf32>
    %27 = arith.mulf %4, %26 : vector<8x32xf32>
    %cst_13 = arith.constant dense<0.000000e+00> : vector<8xf32>
    %28 = vector.multi_reduction <add>, %27, %cst_13 [1] : vector<8x32xf32> to vector<8xf32>
    %29 = vector.shape_cast %28 : vector<8xf32> to vector<8x1xf32>
    %30 = tpu.concatenate %17, %21, %25, %29 in 1 : vector<8x1xf32>, vector<8x1xf32>, vector<8x1xf32>, vector<8x1xf32> -> vector<8x4xf32>
    %31 = vector.broadcast %13 : vector<8x1xf32> to vector<8x4xf32>
    %32 = arith.addf %30, %31 : vector<8x4xf32>
    %cst_14 = arith.constant 0.000000e+00 : f32
    %33 = vector.broadcast %cst_14 : f32 to vector<8x4xf32>
    %34 = arith.cmpf oge, %32, %33 : vector<8x4xf32>
    %cst_15 = arith.constant 0.00999999977 : f32
    %35 = vector.broadcast %cst_15 : f32 to vector<8x4xf32>
    %36 = arith.mulf %35, %32 : vector<8x4xf32>
    %37 = arith.select %34, %32, %36 : vector<8x4xi1>, vector<8x4xf32>
    %cst_16 = arith.constant dense<0xFF800000> : vector<8xf32>
    %38 = vector.multi_reduction <maximumf>, %37, %cst_16 [1] : vector<8x4xf32> to vector<8xf32>
    %39 = vector.shape_cast %38 : vector<8xf32> to vector<8x1xf32>
    %40 = vector.broadcast %39 : vector<8x1xf32> to vector<8x4xf32>
    %41 = arith.subf %37, %40 : vector<8x4xf32>
    %42 = math.exp %41 : vector<8x4xf32>
    %cst_17 = arith.constant dense<0.000000e+00> : vector<8xf32>
    %43 = vector.multi_reduction <add>, %42, %cst_17 [1] : vector<8x4xf32> to vector<8xf32>
    %44 = vector.shape_cast %43 : vector<8xf32> to vector<8x1xf32>
    %cst_18 = arith.constant 1.000000e+00 : f32
    %45 = vector.broadcast %cst_18 : f32 to vector<8x1xf32>
    %46 = arith.divf %45, %44 : vector<8x1xf32>
    %47 = vector.broadcast %46 : vector<8x1xf32> to vector<8x4xf32>
    %48 = arith.mulf %42, %47 : vector<8x4xf32>
    %49 = vector.extract_strided_slice %48 {offsets = [0, 3], sizes = [8, 1], strides = [1, 1]} : vector<8x4xf32> to vector<8x1xf32>
    %50 = vector.broadcast %49 : vector<8x1xf32> to vector<8x32xf32>
    %51 = arith.mulf %50, %4 : vector<8x32xf32>
    %52 = vector.extract_strided_slice %48 {offsets = [0, 0], sizes = [8, 1], strides = [1, 1]} : vector<8x4xf32> to vector<8x1xf32>
    %53 = vector.broadcast %52 : vector<8x1xf32> to vector<8x32xf32>
    %54 = arith.mulf %53, %5 : vector<8x32xf32>
    %55 = arith.addf %51, %54 : vector<8x32xf32>
    %56 = vector.extract_strided_slice %48 {offsets = [0, 1], sizes = [8, 1], strides = [1, 1]} : vector<8x4xf32> to vector<8x1xf32>
    %57 = vector.broadcast %56 : vector<8x1xf32> to vector<8x32xf32>
    %58 = arith.mulf %57, %6 : vector<8x32xf32>
    %59 = arith.addf %55, %58 : vector<8x32xf32>
    %60 = vector.extract_strided_slice %48 {offsets = [0, 2], sizes = [8, 1], strides = [1, 1]} : vector<8x4xf32> to vector<8x1xf32>
    %61 = vector.broadcast %60 : vector<8x1xf32> to vector<8x32xf32>
    %62 = arith.mulf %61, %7 : vector<8x32xf32>
    %63 = arith.addf %59, %62 : vector<8x32xf32>
    %c0_19 = arith.constant 0 : index
    %c0_20 = arith.constant 0 : index
    %64 = vector.load %arg7[%c0_19, %c0_20] : memref<8x32xf32, #tpu.memory_space<vmem>>, vector<8x32xf32>
    tpu.vector_store %arg7[%c0_19, %c0_20], %63 {strides = array<i32>} : memref<8x32xf32, #tpu.memory_space<vmem>>, vector<8x32xf32>,
    return
  }
  func.func @transform_0(%arg0: i32) -> (i32, i32) {
    %c0_i32 = arith.constant 0 : i32
    %c0_i32_0 = arith.constant 0 : i32
    %c0_i32_1 = arith.constant 0 : i32
    return %c0_i32, %c0_i32_0 : i32, i32
  }
  func.func @transform_1(%arg0: i32) -> i32 {
    %c0_i32 = arith.constant 0 : i32
    %c0_i32_0 = arith.constant 0 : i32
    return %c0_i32 : i32
  }
  func.func @transform_2(%arg0: i32) -> (i32, i32) {
    %c0_i32 = arith.constant 0 : i32
    %c0_i32_0 = arith.constant 0 : i32
    return %arg0, %c0_i32 : i32, i32
  }
  func.func @transform_3(%arg0: i32) -> (i32, i32) {
    %c0_i32 = arith.constant 0 : i32
    %c0_i32_0 = arith.constant 0 : i32
    return %arg0, %c0_i32 : i32, i32
  }
  func.func @transform_4(%arg0: i32) -> (i32, i32) {
    %c0_i32 = arith.constant 0 : i32
    %c0_i32_0 = arith.constant 0 : i32
    return %arg0, %c0_i32 : i32, i32
  }
  func.func @transform_5(%arg0: i32) -> (i32, i32) {
    %c0_i32 = arith.constant 0 : i32
    %c0_i32_0 = arith.constant 0 : i32
    return %arg0, %c0_i32 : i32, i32
  }
  func.func @transform_6(%arg0: i32) -> (i32, i32) {
    %c0_i32 = arith.constant 0 : i32
    %c0_i32_0 = arith.constant 0 : i32
    return %arg0, %c0_i32 : i32, i32
  }
}

</mosaic_0001>

<llo_original>
// kernel: tpu_custom_call.1
$region0: #{tpu_custom_call.1}
  #allocation0 [shape = 'u32[]', space=smem, size = 0x4, offset = 0x4, fixed_abs, tag = 'smem constant byte address 0x4 - core index']
  #allocation1 [shape = 'u32[72,128]{1,0:T(1,128)}', space=vmem, size = 0x9000, scoped, tag = 'internal scratch']
  #allocation2 [shape = 'f32[1]{0:T(128)S(6)}', space=smem, size = 0x200, scoped, tag = 'scoped memory for tpu_custom_call.1']
  %s0 = inlined_call_operand.vmem [shape: f32[2,32], index: 0, kind: input, shape index: {}]
  %s1 = inlined_call_operand.<no memory space> [shape: f32[1], index: 1, kind: input, shape index: {}]
  %s2 = inlined_call_operand.hbm [shape: f32[8,32], index: 2, kind: input, shape index: {}]
  %s3 = inlined_call_operand.hbm [shape: f32[8,32], index: 3, kind: input, shape index: {}]
  %s4 = inlined_call_operand.hbm [shape: f32[8,32], index: 4, kind: input, shape index: {}]
  %s5 = inlined_call_operand.hbm [shape: f32[8,32], index: 5, kind: input, shape index: {}]
  %s6 = inlined_call_operand.hbm [shape: f32[8,32], index: 6, kind: output, shape index: {}]
  %s7 = sld [smem:[#allocation0]]
  $region50: #{tpu_custom_call.1} parent=0
    _
  %s9 = ssub.s32 1, %s7
  %s10 = scalar_select 0, %s9, %s7
  %11 = sst [smem:[#allocation2]] %s1
  $region1: #{tpu_custom_call.1} parent=0
    #allocation3 [shape = 'u8[4096]{0}', space=vmem, size = 0x1000, scoped, tag = 'input window, operand 2, single buffered']
    #allocation4 [shape = 's32[1]{0}', space=sflag, size = 0x4, scoped, tag = 'scoped memory for tpu_custom_call.1']
    #allocation5 [shape = 's32[1]{0}', space=sflag, size = 0x4, scoped, tag = 'scoped memory for tpu_custom_call.1']
    #allocation6 [shape = 'u8[4096]{0}', space=vmem, size = 0x1000, scoped, tag = 'input window, operand 3, single buffered']
    #allocation7 [shape = 's32[1]{0}', space=sflag, size = 0x4, scoped, tag = 'scoped memory for tpu_custom_call.1']
    #allocation8 [shape = 'u8[4096]{0}', space=vmem, size = 0x1000, scoped, tag = 'input window, operand 4, single buffered']
    #allocation9 [shape = 'u8[4096]{0}', space=vmem, size = 0x1000, scoped, tag = 'input window, operand 5, single buffered']
    #allocation10 [shape = 's32[1]{0}', space=sflag, size = 0x4, scoped, tag = 'scoped memory for tpu_custom_call.1']
    #allocation11 [shape = 'u8[4096]{0}', space=vmem, size = 0x1000, scoped, tag = 'output window, operand 0, single buffered']
    %12 = vsyncpa [#allocation4], 0
    %13 = vsyncpa [#allocation7], 0
    %14 = vsyncpa [#allocation10], 0
    %15 = vsyncpa [#allocation5], 0
    // Predicated region
    $region2: #{tpu_custom_call.1} parent=1 // pred_check
      _
    $region3: #{tpu_custom_call.1} parent=1 // pred_check_branch
      %17 = sbr.rel (0) target = $region5
    $region4: #{tpu_custom_call.1} parent=1 // pred_region
      _
    $region5: #{tpu_custom_call.1} parent=1 // pred_fallthru
      _
    // Predicated region
    $region6: #{tpu_custom_call.1} parent=1 // pred_check
      _
    $region7: #{tpu_custom_call.1} parent=1 // pred_check_branch
      %19 = sbr.rel (0) target = $region9
    $region8: #{tpu_custom_call.1} parent=1 // pred_region
      _
    $region9: #{tpu_custom_call.1} parent=1 // pred_fallthru
      _
    // Predicated region
    $region10: #{tpu_custom_call.1} parent=1 // pred_check
      _
    $region11: #{tpu_custom_call.1} parent=1 // pred_check_branch
      %21 = sbr.rel (0) target = $region13
    $region12: #{tpu_custom_call.1} parent=1 // pred_region
      %23 = vsyncadd [#allocation4], 0
      %s25 = sshll.u32 %s2, 4
      %s26 = int_to_ptr.hbm [resolvable:$true] %s25
      %s27 = sshll.u32 [#allocation3], 4
      %s28 = int_to_ptr.vmem [resolvable:$true] %s27
      %30 = dma.hbm_to_vmem [thread:$0]  %s26, 128, %s28, [#allocation4]
    $region13: #{tpu_custom_call.1} parent=1 // pred_fallthru
      _
    // Predicated region
    $region14: #{tpu_custom_call.1} parent=1 // pred_check
      _
    $region15: #{tpu_custom_call.1} parent=1 // pred_check_branch
      %32 = sbr.rel (0) target = $region17
    $region16: #{tpu_custom_call.1} parent=1 // pred_region
      %34 = vsyncadd [#allocation7], 0
      %s36 = sshll.u32 %s3, 4
      %s37 = int_to_ptr.hbm [resolvable:$true] %s36
      %s38 = sshll.u32 [#allocation6], 4
      %s39 = int_to_ptr.vmem [resolvable:$true] %s38
      %41 = dma.hbm_to_vmem [thread:$0]  %s37, 128, %s39, [#allocation7]
    $region17: #{tpu_custom_call.1} parent=1 // pred_fallthru
      _
    // Predicated region
    $region18: #{tpu_custom_call.1} parent=1 // pred_check
      _
    $region19: #{tpu_custom_call.1} parent=1 // pred_check_branch
      %43 = sbr.rel (0) target = $region21
    $region20: #{tpu_custom_call.1} parent=1 // pred_region
      %45 = vsyncadd [#allocation7], 0
      %s47 = sshll.u32 %s4, 4
      %s48 = int_to_ptr.hbm [resolvable:$true] %s47
      %s49 = sshll.u32 [#allocation8], 4
      %s50 = int_to_ptr.vmem [resolvable:$true] %s49
      %52 = dma.hbm_to_vmem [thread:$0]  %s48, 128, %s50, [#allocation7]
    $region21: #{tpu_custom_call.1} parent=1 // pred_fallthru
      _
    // Predicated region
    $region22: #{tpu_custom_call.1} parent=1 // pred_check
      _
    $region23: #{tpu_custom_call.1} parent=1 // pred_check_branch
      %54 = sbr.rel (0) target = $region25
    $region24: #{tpu_custom_call.1} parent=1 // pred_region
      %56 = vsyncadd [#allocation10], 0
      %s58 = sshll.u32 %s5, 4
      %s59 = int_to_ptr.hbm [resolvable:$true] %s58
      %s60 = sshll.u32 [#allocation9], 4
      %s61 = int_to_ptr.vmem [resolvable:$true] %s60
      %63 = dma.hbm_to_vmem [thread:$0]  %s59, 128, %s61, [#allocation10]
    $region25: #{tpu_custom_call.1} parent=1 // pred_fallthru
      _
    // Predicated region
    $region26: #{tpu_custom_call.1} parent=1 // pred_check
      _
    $region27: #{tpu_custom_call.1} parent=1 // pred_check_branch
      %65 = sbr.rel (0) target = $region29
    $region28: #{tpu_custom_call.1} parent=1 // pred_region
      %67 = dma.done [#allocation4], 128
    $region29: #{tpu_custom_call.1} parent=1 // pred_fallthru
      _
    // Predicated region
    $region30: #{tpu_custom_call.1} parent=1 // pred_check
      _
    $region31: #{tpu_custom_call.1} parent=1 // pred_check_branch
      %69 = sbr.rel (0) target = $region33
    $region32: #{tpu_custom_call.1} parent=1 // pred_region
      %71 = dma.done [#allocation7], 128
    $region33: #{tpu_custom_call.1} parent=1 // pred_fallthru
      _
    // Predicated region
    $region34: #{tpu_custom_call.1} parent=1 // pred_check
      _
    $region35: #{tpu_custom_call.1} parent=1 // pred_check_branch
      %73 = sbr.rel (0) target = $region37
    $region36: #{tpu_custom_call.1} parent=1 // pred_region
      %75 = dma.done [#allocation7], 128
    $region37: #{tpu_custom_call.1} parent=1 // pred_fallthru
      _
    // Predicated region
    $region38: #{tpu_custom_call.1} parent=1 // pred_check
      _
    $region39: #{tpu_custom_call.1} parent=1 // pred_check_branch
      %77 = sbr.rel (0) target = $region41
    $region40: #{tpu_custom_call.1} parent=1 // pred_region
      %79 = dma.done [#allocation10], 128
    $region41: #{tpu_custom_call.1} parent=1 // pred_fallthru
      _
    %v80 = vld [vmem:[%s0] sm:$0x3]
    %s81 = sld [smem:[#allocation2]]
    %v82 = vld [vmem:[#allocation3] sm:$0xff]
    %v83 = vld [vmem:[#allocation6] sm:$0xff]
    %v84 = vld [vmem:[#allocation8] sm:$0xff]
    %v85 = vld [vmem:[#allocation9] sm:$0xff]
    %v86 = vperm.slane %v80, 0
    %v87 = vmul.f32 %v82, %v86
    %vm88 = vcmask 261120
    %v89 = vsel %vm88, %v87, 0.0
    %90 = vadd.xlane.f32.xlu0 %v89
    %v91 = vpop.xlane.xlu0 %90
    %v92 = vstv %s81
    %v93 = vadd.f32 %v91, %v92
    %v94 = vperm.slane %v80, 1
    %v95 = vmul.f32 %v83, %v94
    %v96 = vsel %vm88, %v95, 0.0
    %97 = vadd.xlane.f32.xlu0 %v96
    %v98 = vpop.xlane.xlu0 %97
    %v99 = vmul.f32 %v84, %v94
    %v100 = vsel %vm88, %v99, 0.0
    %101 = vadd.xlane.f32.xlu0 %v100
    %v102 = vpop.xlane.xlu0 %101
    %v103 = vmul.f32 %v85, %v94
    %v104 = vsel %vm88, %v103, 0.0
    %105 = vadd.xlane.f32.xlu0 %v104
    %v106 = vpop.xlane.xlu0 %105
    %v107 = vmul.f32 %v82, %v94
    %v108 = vsel %vm88, %v107, 0.0
    %109 = vadd.xlane.f32.xlu0 %v108
    %v110 = vpop.xlane.xlu0 %109
    %vm111 = vcmask 7168
    %v112 = vsel %vm111, %v98, %v102
    %vm113 = vcmask 15360
    %v114 = vsel %vm113, %v112, %v106
    %vm115 = vcmask 23552
    %v116 = vsel %vm115, %v114, %v110
    %v117 = vadd.f32 %v116, %v93
    %vm118 = vcmp.ge.f32.partialorder %v117, 0.0
    %v119 = vmul.f32 %v117, 0.01
    %v120 = vsel %vm118, %v117, %v119
    %vm121 = vcmask 31744
    %v122 = vsel %vm121, %v120, -inf
    %123 = vmax.xlane.f32.xlu0 %v122
    %v124 = vpop.xlane.xlu0 %123
    %v125 = vsub.f32 %v120, %v124
    %v126 = vmul.f32 %v125, 1.442695
    %v127 = vpow.pop %v126
    %v128 = vsel %vm121, %v127, 0.0
    %129 = vadd.xlane.f32.xlu0 %v128
    %v130 = vpop.xlane.xlu0 %129
    %v131 = vrcp.pop %v130
    %v132 = vmul.f32 %v130, %v131
    %v133 = vsub.f32 1.0, %v132
    %v134 = vmul.f32 %v131, %v133
    %v135 = vadd.f32 %v131, %v134
    %vm136 = vweird.f32 %v130
    %vm137 = vweird.f32 %v131
    %vm138 = vmor %vm136, %vm137
    %v139 = vsel %vm138, %v131, %v135
    %v140 = vand.u32 2147483647, %v130
    %vm141 = vcmp.eq.f32.partialorder %v140, 8.507059e+37
    %v142 = vand.u32 %v130, 2147483648
    %v143 = vor.u32 1.1754944e-38, %v142
    %v144 = vsel %vm141, %v143, %v139
    %v145 = vmul.f32 1.0, %v144
    %v146 = vmul.f32 %v127, %v145
    %148 = vset.pattern.permute.xlu0 3
    %149 = vperm.xlu0 %148, %v146
    %v150 = vpop.permute.xlu0 %149
    %v152 = vmul.f32 %v150, %v82
    %153 = vset.pattern.permute.xlu0 0
    %154 = vperm.xlu0 %153, %v146
    %v155 = vpop.permute.xlu0 %154
    %v157 = vmul.f32 %v155, %v83
    %v158 = vadd.f32 %v152, %v157
    %159 = vset.pattern.permute.xlu0 1
    %160 = vperm.xlu0 %159, %v146
    %v161 = vpop.permute.xlu0 %160
    %v163 = vmul.f32 %v161, %v84
    %v164 = vadd.f32 %v158, %v163
    %165 = vset.pattern.permute.xlu0 2
    %166 = vperm.xlu0 %165, %v146
    %v167 = vpop.permute.xlu0 %166
    %v169 = vmul.f32 %v167, %v85
    %v170 = vadd.f32 %v164, %v169
    %171 = vst.msk [vmem:[#allocation11] sm:$0xff] %vm88, %v170
    // Predicated region
    $region42: #{tpu_custom_call.1} parent=1 // pred_check
      _
    $region43: #{tpu_custom_call.1} parent=1 // pred_check_branch
      %173 = sbr.rel (0) target = $region45
    $region44: #{tpu_custom_call.1} parent=1 // pred_region
      %175 = vsyncadd [#allocation5], 0
      %s177 = sshll.u32 [#allocation11], 4
      %s178 = int_to_ptr.vmem [resolvable:$true] %s177
      %s179 = sshll.u32 %s6, 4
      %s180 = int_to_ptr.hbm [resolvable:$true] %s179
      %182 = dma.vmem_to_hbm [thread:$0]  %s178, 128, %s180, [#allocation5]
    $region45: #{tpu_custom_call.1} parent=1 // pred_fallthru
      _
    // Predicated region
    $region46: #{tpu_custom_call.1} parent=1 // pred_check
      _
    $region47: #{tpu_custom_call.1} parent=1 // pred_check_branch
      %184 = sbr.rel (0) target = $region49
    $region48: #{tpu_custom_call.1} parent=1 // pred_region
      %186 = dma.done [#allocation5], 128
    $region49: #{tpu_custom_call.1} parent=1 // pred_fallthru
      _
    %187 = vsyncpa [#allocation4], 1
    %188 = vsyncpa [#allocation7], 1
    %189 = vsyncpa [#allocation10], 1
    %190 = vsyncpa [#allocation5], 1

</llo_original>
